<compile_context>
chip_gen: v7x
topology: tpu7x:2x2x1
jax: 0.10.0
libtpu: 0.0.40
codegen_flags: <defaults>
</compile_context>

<pallas_src>
import functools

import jax
import jax.numpy as jnp
from jax.experimental import pallas as pl
from jax.experimental.pallas import tpu as pltpu


def _make_mls_kernel(gamma, feat_dim):
    """Build an MLS kernel with gamma and the feature dim baked in at trace time."""
    gamma_f = float(gamma)
    g_int = int(round(gamma_f))
    gamma_is_small_int = (gamma_f == float(g_int)) and (0 <= g_int <= 8)
    # Plain Python floats only (no jnp constants in the closure -> no captured
    # tracer constants at kernel-trace time).
    scale = -0.5 / float(feat_dim)     # folds the -0.5 and the mean's 1/D
    eps_sq = 1e-24                     # F.normalize clamp: max(||x||, 1e-12) squared

    def kernel(mu0_ref, mu1_ref, s0_ref, s1_ref, out_ref):
        mu0 = mu0_ref[...].astype(jnp.float32)
        mu1 = mu1_ref[...].astype(jnp.float32)
        s0 = s0_ref[...].astype(jnp.float32)
        s1 = s1_ref[...].astype(jnp.float32)

        # F.normalize(x, dim=-1): x / max(||x||, 1e-12)
        #   == x * rsqrt(max(||x||^2, 1e-24))   (per-row rsqrt + multiply, no divides)
        ss0 = jnp.sum(mu0 * mu0, axis=-1, keepdims=True)
        ss1 = jnp.sum(mu1 * mu1, axis=-1, keepdims=True)
        mu0n = mu0 * jax.lax.rsqrt(jnp.maximum(ss0, eps_sq))
        mu1n = mu1 * jax.lax.rsqrt(jnp.maximum(ss1, eps_sq))

        d = mu0n - mu1n
        up = d * d

        s = s0 + s1
        if gamma_is_small_int:
            if g_int == 0:
                # down == 1  ->  up / down + log(down) == up
                val = up
            else:
                # down = s**g via pure VPU multiplies.
                down = s
                for _ in range(g_int - 1):
                    down = down * s
                # up / down via EUP approximate reciprocal + one Newton step
                # (keeps the divide off the VALU; ~1e-7 rel error after refine).
                r = pl.reciprocal(down, approx=True)
                r = r * (2.0 - down * r)
                val = up * r + gamma_f * jnp.log(s)
        else:
            # General gamma: one log + one exp per element.
            log_down = gamma_f * jnp.log(s)            # log((s0+s1)**gamma)
            val = up * jnp.exp(-log_down) + log_down

        out_ref[...] = (jnp.sum(val, axis=-1, keepdims=True) * scale).astype(out_ref.dtype)

    return kernel


def _vmem_capacity_bytes():
    """Trace-time VMEM capacity query; None if it cannot be determined."""
    try:
        return int(pltpu.get_tpu_info().vmem_capacity_bytes)
    except Exception:
        return None


def _choose_batch_tile(B, D, itemsize):
    """Pick a batch tile TB (multiple of 8, or ==B for tiny B) and a vmem limit."""
    cap = _vmem_capacity_bytes()
    if cap is None or cap <= 64 * 1024 * 1024:
        # v7x (64 MiB VMEM, 2 TCs) or unknown: conservative budget, and target
        # >= 4 grid steps so each TensorCore gets >= 2 pipelined steps.
        input_budget = 24 * 1024 * 1024
        min_steps = 4
        vmem_limit = 32 * 1024 * 1024
    else:
        # v5e / v6e: 128 MiB VMEM, purely HBM-bandwidth bound -> bigger tiles.
        input_budget = 48 * 1024 * 1024
        min_steps = 2
        vmem_limit = 96 * 1024 * 1024

    row_bytes = D * itemsize
    # Double-buffered inputs: 4 arrays x 2 buffers x TB x row_bytes <= budget.
    tb_budget = input_budget // (4 * 2 * row_bytes)
    # Per-input block target ~4 MiB (amortizes the ~0.35 us per-grid-step cost).
    tb_block = (4 * 1024 * 1024) // row_bytes
    TB = max(8, (min(tb_budget, tb_block) // 8) * 8)

    if B <= 8:
        TB = B                                 # block == full array dim: always legal
    else:
        TB = min(TB, (B // 8) * 8)             # keep TB a multiple of 8 and <= B
        # Prefer >= min_steps grid steps when the batch permits (megacore sharding
        # + steady-state double buffering).
        while -(-B // TB) < min_steps and TB > 8:
            TB = max(8, ((TB // 2) // 8) * 8)

    return TB, vmem_limit


@functools.partial(jax.jit, static_argnames=("gamma",))
def mls_pallas(mu_0, mu_1, sigma_0, sigma_1, gamma):
    """Pallas TPU implementation of the MLS forward pass.

    mu_0, mu_1, sigma_0, sigma_1: [B, D] float32 or bfloat16 (bf16 preferred for
        bandwidth: this kernel is HBM-bound and compute is always f32 inside).
    gamma: static Python float (baked into the kernel at trace time)
    returns: [B] float32
    """
    B, D = mu_0.shape
    assert mu_1.shape == (B, D) and sigma_0.shape == (B, D) and sigma_1.shape == (B, D)

    itemsize = jnp.dtype(mu_0.dtype).itemsize
    TB, vmem_limit = _choose_batch_tile(B, D, itemsize)

    grid = (-(-B // TB),)   # cdiv; ragged last block handled by Pallas (rows >= B discarded)
    kernel = _make_mls_kernel(gamma, D)

    row_spec = pl.BlockSpec((TB, D), lambda i: (i, 0))
    out2d = pl.pallas_call(
        kernel,
        out_shape=jax.ShapeDtypeStruct((B, 1), jnp.float32),
        grid_spec=pl.GridSpec(
            grid=grid,
            in_specs=[row_spec, row_spec, row_spec, row_spec],
            out_specs=pl.BlockSpec((TB, 1), lambda i: (i, 0)),
        ),
        compiler_params=pltpu.CompilerParams(
            dimension_semantics=("parallel",),
            vmem_limit_bytes=vmem_limit,
        ),
    )(mu_0, mu_1, sigma_0, sigma_1)

    return out2d[:, 0]  # [B]


def mls_reference(mu_0, mu_1, sigma_0, sigma_1, gamma):
    """Pure-JAX reference mirroring the PyTorch module."""
    def normalize(x):
        n = jnp.sqrt(jnp.sum(x * x, axis=-1, keepdims=True))
        return x / jnp.maximum(n, 1e-12)
    mu_0 = normalize(mu_0)
    mu_1 = normalize(mu_1)
    up = (mu_0 - mu_1) ** 2
    down = (sigma_0 + sigma_1) ** gamma
    return -0.5 * jnp.mean(up / down + jnp.log(down), axis=-1)


if __name__ == "__main__":
    key = jax.random.PRNGKey(0)

    # Case 1: small aligned shape, integer gamma (pure-VPU `down`, EUP recip path).
    k0, k1, k2, k3 = jax.random.split(key, 4)
    B, D = 8, 128
    mu_0 = jax.random.normal(k0, (B, D), dtype=jnp.float32)
    mu_1 = jax.random.normal(k1, (B, D), dtype=jnp.float32)
    sigma_0 = jax.nn.softplus(jax.random.normal(k2, (B, D), dtype=jnp.float32))
    sigma_1 = jax.nn.softplus(jax.random.normal(k3, (B, D), dtype=jnp.float32))
    gamma = 2.0

    out = mls_pallas(mu_0, mu_1, sigma_0, sigma_1, gamma)
    jax.block_until_ready(out)
    ref = mls_reference(mu_0, mu_1, sigma_0, sigma_1, gamma)
    assert out.shape == (B,)
    assert jnp.allclose(out, ref, rtol=1e-5, atol=1e-5), (out, ref)

    # Case 2: batch not a multiple of the tile (exercises the ragged last block,
    # no wrapper padding) + non-integer gamma (exp/log path).
    k4, k5, k6, k7 = jax.random.split(jax.random.PRNGKey(1), 4)
    B2, D2 = 20, 256
    mu_0b = jax.random.normal(k4, (B2, D2), dtype=jnp.float32)
    mu_1b = jax.random.normal(k5, (B2, D2), dtype=jnp.float32)
    sigma_0b = jax.nn.softplus(jax.random.normal(k6, (B2, D2), dtype=jnp.float32))
    sigma_1b = jax.nn.softplus(jax.random.normal(k7, (B2, D2), dtype=jnp.float32))
    gamma2 = 1.5

    out2 = mls_pallas(mu_0b, mu_1b, sigma_0b, sigma_1b, gamma2)
    jax.block_until_ready(out2)
    ref2 = mls_reference(mu_0b, mu_1b, sigma_0b, sigma_1b, gamma2)
    assert out2.shape == (B2,)
    assert jnp.allclose(out2, ref2, rtol=1e-5, atol=1e-5), (out2, ref2)

    print("KERNEL_OK")
</pallas_src>

<mosaic_0001>
module attributes {stable_mosaic.version = 11 : i64} {
  func.func @kernel(%arg0: i32, %arg1: memref<8x128xf32, #tpu.memory_space<vmem>>, %arg2: memref<8x128xf32, #tpu.memory_space<vmem>>, %arg3: memref<8x128xf32, #tpu.memory_space<vmem>>, %arg4: memref<8x128xf32, #tpu.memory_space<vmem>>, %arg5: memref<8x1xf32, #tpu.memory_space<vmem>>) attributes {dimension_semantics = [#tpu.dimension_semantics<parallel>], iteration_bounds = array<i64: 1>, scalar_prefetch = 0 : i64, scratch_operands = 0 : i64, tpu.core_type = #tpu.core_type<tc>, window_params = [{transform_indices = @transform_0, window_bounds = array<i64: 8, 128>}, {transform_indices = @transform_1, window_bounds = array<i64: 8, 128>}, {transform_indices = @transform_2, window_bounds = array<i64: 8, 128>}, {transform_indices = @transform_3, window_bounds = array<i64: 8, 128>}, {transform_indices = @transform_4, window_bounds = array<i64: 8, 1>}]} {
    %c0 = arith.constant 0 : index
    %c0_0 = arith.constant 0 : index
    %0 = vector.load %arg1[%c0, %c0_0] : memref<8x128xf32, #tpu.memory_space<vmem>>, vector<8x128xf32>
    %c0_1 = arith.constant 0 : index
    %c0_2 = arith.constant 0 : index
    %1 = vector.load %arg2[%c0_1, %c0_2] : memref<8x128xf32, #tpu.memory_space<vmem>>, vector<8x128xf32>
    %c0_3 = arith.constant 0 : index
    %c0_4 = arith.constant 0 : index
    %2 = vector.load %arg3[%c0_3, %c0_4] : memref<8x128xf32, #tpu.memory_space<vmem>>, vector<8x128xf32>
    %c0_5 = arith.constant 0 : index
    %c0_6 = arith.constant 0 : index
    %3 = vector.load %arg4[%c0_5, %c0_6] : memref<8x128xf32, #tpu.memory_space<vmem>>, vector<8x128xf32>
    %4 = arith.mulf %0, %0 : vector<8x128xf32>
    %cst = arith.constant dense<0.000000e+00> : vector<8xf32>
    %5 = vector.multi_reduction <add>, %4, %cst [1] : vector<8x128xf32> to vector<8xf32>
    %6 = vector.shape_cast %5 : vector<8xf32> to vector<8x1xf32>
    %7 = arith.mulf %1, %1 : vector<8x128xf32>
    %cst_7 = arith.constant dense<0.000000e+00> : vector<8xf32>
    %8 = vector.multi_reduction <add>, %7, %cst_7 [1] : vector<8x128xf32> to vector<8xf32>
    %9 = vector.shape_cast %8 : vector<8xf32> to vector<8x1xf32>
    %cst_8 = arith.constant 1.000000e-24 : f32
    %10 = vector.broadcast %cst_8 : f32 to vector<8x1xf32>
    %11 = arith.maximumf %6, %10 : vector<8x1xf32>
    %12 = math.rsqrt %11 : vector<8x1xf32>
    %13 = vector.broadcast %12 : vector<8x1xf32> to vector<8x128xf32>
    %14 = arith.mulf %0, %13 : vector<8x128xf32>
    %cst_9 = arith.constant 1.000000e-24 : f32
    %15 = vector.broadcast %cst_9 : f32 to vector<8x1xf32>
    %16 = arith.maximumf %9, %15 : vector<8x1xf32>
    %17 = math.rsqrt %16 : vector<8x1xf32>
    %18 = vector.broadcast %17 : vector<8x1xf32> to vector<8x128xf32>
    %19 = arith.mulf %1, %18 : vector<8x128xf32>
    %20 = arith.subf %14, %19 : vector<8x128xf32>
    %21 = arith.mulf %20, %20 : vector<8x128xf32>
    %22 = arith.addf %2, %3 : vector<8x128xf32>
    %23 = arith.mulf %22, %22 : vector<8x128xf32>
    %24 = tpu.reciprocal %23 {approx = true} : vector<8x128xf32> -> vector<8x128xf32>
    %25 = arith.mulf %23, %24 : vector<8x128xf32>
    %cst_10 = arith.constant 2.000000e+00 : f32
    %26 = vector.broadcast %cst_10 : f32 to vector<8x128xf32>
    %27 = arith.subf %26, %25 : vector<8x128xf32>
    %28 = arith.mulf %24, %27 : vector<8x128xf32>
    %29 = arith.mulf %21, %28 : vector<8x128xf32>
    %30 = math.log %22 : vector<8x128xf32>
    %cst_11 = arith.constant 2.000000e+00 : f32
    %31 = vector.broadcast %cst_11 : f32 to vector<8x128xf32>
    %32 = arith.mulf %31, %30 : vector<8x128xf32>
    %33 = arith.addf %29, %32 : vector<8x128xf32>
    %cst_12 = arith.constant dense<0.000000e+00> : vector<8xf32>
    %34 = vector.multi_reduction <add>, %33, %cst_12 [1] : vector<8x128xf32> to vector<8xf32>
    %35 = vector.shape_cast %34 : vector<8xf32> to vector<8x1xf32>
    %cst_13 = arith.constant -3.906250e-03 : f32
    %36 = vector.broadcast %cst_13 : f32 to vector<8x1xf32>
    %37 = arith.mulf %35, %36 : vector<8x1xf32>
    %c0_14 = arith.constant 0 : index
    %c0_15 = arith.constant 0 : index
    %38 = vector.load %arg5[%c0_14, %c0_15] : memref<8x1xf32, #tpu.memory_space<vmem>>, vector<8x1xf32>
    tpu.vector_store %arg5[%c0_14, %c0_15], %37 {strides = array<i32>} : memref<8x1xf32, #tpu.memory_space<vmem>>, vector<8x1xf32>,
    return
  }
  func.func @transform_0(%arg0: i32) -> (i32, i32) {
    %c0_i32 = arith.constant 0 : i32
    %c0_i32_0 = arith.constant 0 : i32
    return %arg0, %c0_i32 : i32, i32
  }
  func.func @transform_1(%arg0: i32) -> (i32, i32) {
    %c0_i32 = arith.constant 0 : i32
    %c0_i32_0 = arith.constant 0 : i32
    return %arg0, %c0_i32 : i32, i32
  }
  func.func @transform_2(%arg0: i32) -> (i32, i32) {
    %c0_i32 = arith.constant 0 : i32
    %c0_i32_0 = arith.constant 0 : i32
    return %arg0, %c0_i32 : i32, i32
  }
  func.func @transform_3(%arg0: i32) -> (i32, i32) {
    %c0_i32 = arith.constant 0 : i32
    %c0_i32_0 = arith.constant 0 : i32
    return %arg0, %c0_i32 : i32, i32
  }
  func.func @transform_4(%arg0: i32) -> (i32, i32) {
    %c0_i32 = arith.constant 0 : i32
    %c0_i32_0 = arith.constant 0 : i32
    return %arg0, %c0_i32 : i32, i32
  }
}

</mosaic_0001>

<llo_original>
// kernel: mls_pallas.1
$region0: #{mls_pallas.1}
  #allocation0 [shape = 'u32[]', space=smem, size = 0x4, offset = 0x4, fixed_abs, tag = 'smem constant byte address 0x4 - core index']
  #allocation1 [shape = 'u32[144,128]{1,0:T(1,128)}', space=vmem, size = 0x12000, scoped, tag = 'internal scratch']
  %s0 = inlined_call_operand.hbm [shape: f32[8,128], index: 0, kind: input, shape index: {}]
  %s1 = inlined_call_operand.hbm [shape: f32[8,128], index: 1, kind: input, shape index: {}]
  %s2 = inlined_call_operand.hbm [shape: f32[8,128], index: 2, kind: input, shape index: {}]
  %s3 = inlined_call_operand.vmem [shape: f32[8,128], index: 3, kind: input, shape index: {}]
  %s4 = inlined_call_operand.vmem [shape: f32[8,1], index: 4, kind: output, shape index: {}]
  %s5 = sld [smem:[#allocation0]]
  $region38: #{mls_pallas.1} parent=0
    _
  %s7 = ssub.s32 1, %s5
  %s8 = scalar_select 0, %s7, %s5
  $region1: #{mls_pallas.1} parent=0
    #allocation2 [shape = 'u8[4096]{0}', space=vmem, size = 0x1000, scoped, tag = 'input window, operand 0, single buffered']
    #allocation3 [shape = 's32[1]{0}', space=sflag, size = 0x4, scoped, tag = 'scoped memory for mls_pallas.1']
    #allocation4 [shape = 'u8[4096]{0}', space=vmem, size = 0x1000, scoped, tag = 'input window, operand 1, single buffered']
    #allocation5 [shape = 's32[1]{0}', space=sflag, size = 0x4, scoped, tag = 'scoped memory for mls_pallas.1']
    #allocation6 [shape = 'u8[4096]{0}', space=vmem, size = 0x1000, scoped, tag = 'input window, operand 2, single buffered']
    %9 = vsyncpa [#allocation3], 0
    %10 = vsyncpa [#allocation5], 0
    // Predicated region
    $region2: #{mls_pallas.1} parent=1 // pred_check
      _
    $region3: #{mls_pallas.1} parent=1 // pred_check_branch
      %12 = sbr.rel (0) target = $region5
    $region4: #{mls_pallas.1} parent=1 // pred_region
      %s14 = ssub.s32 128, 128
      %15 = vsyncadd [#allocation3], %s14
      %s17 = sshll.u32 [#allocation2], 4
      %s18 = int_to_ptr.vmem [resolvable:$true] %s17
      %20 = dma.hbm_to_vmem [thread:$0]  %s0, 128, %s18, [#allocation3]
    $region5: #{mls_pallas.1} parent=1 // pred_fallthru
      _
    // Predicated region
    $region6: #{mls_pallas.1} parent=1 // pred_check
      _
    $region7: #{mls_pallas.1} parent=1 // pred_check_branch
      %22 = sbr.rel (0) target = $region9
    $region8: #{mls_pallas.1} parent=1 // pred_region
      %s24 = ssub.s32 128, 128
      %25 = vsyncadd [#allocation5], %s24
      %s27 = sshll.u32 [#allocation4], 4
      %s28 = int_to_ptr.vmem [resolvable:$true] %s27
      %30 = dma.hbm_to_vmem [thread:$0]  %s1, 128, %s28, [#allocation5]
    $region9: #{mls_pallas.1} parent=1 // pred_fallthru
      _
    // Predicated region
    $region10: #{mls_pallas.1} parent=1 // pred_check
      _
    $region11: #{mls_pallas.1} parent=1 // pred_check_branch
      %32 = sbr.rel (0) target = $region13
    $region12: #{mls_pallas.1} parent=1 // pred_region
      %s34 = ssub.s32 128, 128
      %35 = vsyncadd [#allocation5], %s34
      %s37 = sshll.u32 [#allocation6], 4
      %s38 = int_to_ptr.vmem [resolvable:$true] %s37
      %40 = dma.hbm_to_vmem [thread:$0]  %s2, 128, %s38, [#allocation5]
    $region13: #{mls_pallas.1} parent=1 // pred_fallthru
      _
    // Predicated region
    $region14: #{mls_pallas.1} parent=1 // pred_check
      _
    $region15: #{mls_pallas.1} parent=1 // pred_check_branch
      %42 = sbr.rel (0) target = $region17
    $region16: #{mls_pallas.1} parent=1 // pred_region
      _
    $region17: #{mls_pallas.1} parent=1 // pred_fallthru
      _
    // Predicated region
    $region18: #{mls_pallas.1} parent=1 // pred_check
      _
    $region19: #{mls_pallas.1} parent=1 // pred_check_branch
      %44 = sbr.rel (0) target = $region21
    $region20: #{mls_pallas.1} parent=1 // pred_region
      %45 = dma.done [#allocation3], 128
    $region21: #{mls_pallas.1} parent=1 // pred_fallthru
      _
    // Predicated region
    $region22: #{mls_pallas.1} parent=1 // pred_check
      _
    $region23: #{mls_pallas.1} parent=1 // pred_check_branch
      %47 = sbr.rel (0) target = $region25
    $region24: #{mls_pallas.1} parent=1 // pred_region
      %48 = dma.done [#allocation5], 128
    $region25: #{mls_pallas.1} parent=1 // pred_fallthru
      _
    // Predicated region
    $region26: #{mls_pallas.1} parent=1 // pred_check
      _
    $region27: #{mls_pallas.1} parent=1 // pred_check_branch
      %50 = sbr.rel (0) target = $region29
    $region28: #{mls_pallas.1} parent=1 // pred_region
      %51 = dma.done [#allocation5], 128
    $region29: #{mls_pallas.1} parent=1 // pred_fallthru
      _
    %v52 = vld [vmem:[#allocation2] sm:$0xff]
    %v53 = vld [vmem:[#allocation4] sm:$0xff]
    %v54 = vld [vmem:[#allocation6] sm:$0xff]
    %v55 = vld [vmem:[%s3] sm:$0xff]
    %v56 = vmul.f32 %v52, %v52
    %57 = vadd.xlane.f32.xlu0 %v56
    %v58 = vpop.xlane.xlu0 %57
    %v59 = vmul.f32 %v53, %v53
    %60 = vadd.xlane.f32.xlu0 %v59
    %v61 = vpop.xlane.xlu0 %60
    %v62 = vmax.f32 %v58, 1e-24
    %v63 = vrsqrt.pop %v62
    %v64 = vmul.f32 %v52, %v63
    %v65 = vmax.f32 %v61, 1e-24
    %v66 = vrsqrt.pop %v65
    %v67 = vmul.f32 %v53, %v66
    %v68 = vsub.f32 %v64, %v67
    %v69 = vmul.f32 %v68, %v68
    %v70 = vadd.f32 %v54, %v55
    %v71 = vmul.f32 %v70, %v70
    %v72 = vrcp.pop %v71
    %v73 = vmul.f32 %v71, %v72
    %v74 = vsub.f32 2.0, %v73
    %v75 = vmul.f32 %v72, %v74
    %v76 = vmul.f32 %v69, %v75
    %v77 = vlog2.pop %v70
    %v78 = vmul.f32 %v77, 0.6931472
    %v79 = vmul.f32 %v78, 2.0
    %v80 = vadd.f32 %v76, %v79
    %81 = vadd.xlane.f32.xlu0 %v80
    %v82 = vpop.xlane.xlu0 %81
    %v83 = vmul.f32 %v82, -0.00390625
    %vm84 = vcmask 7168
    %85 = vst.msk [vmem:[%s4] sm:$0xff] %vm84, %v83
    // Predicated region
    $region30: #{mls_pallas.1} parent=1 // pred_check
      _
    $region31: #{mls_pallas.1} parent=1 // pred_check_branch
      %87 = sbr.rel (0) target = $region33
    $region32: #{mls_pallas.1} parent=1 // pred_region
      _
    $region33: #{mls_pallas.1} parent=1 // pred_fallthru
      _
    // Predicated region
    $region34: #{mls_pallas.1} parent=1 // pred_check
      _
    $region35: #{mls_pallas.1} parent=1 // pred_check_branch
      %89 = sbr.rel (0) target = $region37
    $region36: #{mls_pallas.1} parent=1 // pred_region
      _
    $region37: #{mls_pallas.1} parent=1 // pred_fallthru
      _
    %90 = vsyncpa [#allocation3], 1
    %91 = vsyncpa [#allocation5], 1

</llo_original>
